<compile_context>
chip_gen: v6e
topology: v6e:2x2x1
jax: 0.10.0
libtpu: 0.0.40
codegen_flags: <defaults>
</compile_context>

<pallas_src>
import jax
import jax.numpy as jnp
from jax.experimental import pallas as pl
from jax.experimental.pallas import tpu as pltpu

FEATURES = 512
# fused head output columns: [MI, FFR_1, FFR_2, A, stenosis x 4]  -> 8 total
N_OUT = 8


def _fused_heads_kernel(x_ref, w_ref, b_ref, o_ref):
    # x_ref: (TM, 512)   w_ref: (512, 8)   b_ref: (1, 8)   o_ref: (TM, 8)
    acc = jnp.dot(x_ref[...], w_ref[...], preferred_element_type=jnp.float32)
    acc = acc + b_ref[...].astype(jnp.float32)

    # Per-column activations (sigmoid goes to the EUP, essentially free here).
    s = jax.nn.sigmoid(acc)
    col = jax.lax.broadcasted_iota(jnp.int32, acc.shape, 1)
    out = jnp.where(
        col == 0, s,                              # MI:        sigmoid
        jnp.where(
            col <= 2, 0.6 + 0.8 * s,              # FFR (x2):  0.6 + 0.8*sigmoid
            jnp.where(
                col == 3, 0.8 * s,                # A:         0.8*sigmoid
                acc,                              # stenosis:  raw linear
            ),
        ),
    )
    o_ref[...] = out.astype(o_ref.dtype)


def multitask_heads_forward(x, w_t, b, *, tm=2048):
    """Fused task-head forward.

    x   : (B, 512) features (f32; bf16 also works, accumulation stays f32)
    w_t : (512, 8) pre-transposed, column order [MI, FFR1, FFR2, A, stenosis*4]
    b   : (8,)     biases in the same column order

    Returns (MI_out, FFR_out1, FFR_out2, A_out, stenosis_out).
    """
    B, K = x.shape
    assert K == FEATURES
    assert w_t.shape == (FEATURES, N_OUT)
    assert b.shape == (N_OUT,)

    # Batch tile: big enough to saturate HBM BW, small enough that the
    # double-buffered x tile stays well inside scoped VMEM on v5e/v6e/v7x
    # (2 * 2048 * 512 * 4B = 8 MiB for f32 x).
    if B >= tm:
        tm_eff = tm                      # multiple of 8 by construction
    else:
        tm_eff = B                       # full-dim block is always legal

    b2d = b.reshape(1, N_OUT)

    out = pl.pallas_call(
        _fused_heads_kernel,
        out_shape=jax.ShapeDtypeStruct((B, N_OUT), jnp.float32),
        grid_spec=pltpu.PrefetchScalarGridSpec(
            num_scalar_prefetch=0,
            grid=(pl.cdiv(B, tm_eff),),
            in_specs=[
                pl.BlockSpec((tm_eff, FEATURES), lambda i: (i, 0)),   # x: streamed
                pl.BlockSpec((FEATURES, N_OUT), lambda i: (0, 0)),    # W: resident
                pl.BlockSpec((1, N_OUT), lambda i: (0, 0)),           # b: resident
            ],
            out_specs=pl.BlockSpec((tm_eff, N_OUT), lambda i: (i, 0)),
        ),
        compiler_params=pltpu.CompilerParams(
            # No cross-step reduction (K lives entirely inside the block), so
            # the batch axis is embarrassingly parallel -> 2-TC sharding on v7x.
            dimension_semantics=("parallel",),
        ),
    )(x, w_t, b2d)

    mi_out = out[:, 0:1]
    ffr_out1 = out[:, 1:2]
    ffr_out2 = out[:, 2:3]
    a_out = out[:, 3:4]
    stenosis_out = out[:, 4:8]
    return mi_out, ffr_out1, ffr_out2, a_out, stenosis_out


if __name__ == "__main__":
    key = jax.random.PRNGKey(0)
    keys = jax.random.split(key, 11)

    B = 8
    bound = 1.0 / (FEATURES ** 0.5)

    def init_linear(kw, kb, out_dim):
        w = jax.random.uniform(kw, (out_dim, FEATURES), jnp.float32, -bound, bound)
        bb = jax.random.uniform(kb, (out_dim,), jnp.float32, -bound, bound)
        return w, bb

    mi_w, mi_b = init_linear(keys[0], keys[1], 1)        # MI head
    f1_w, f1_b = init_linear(keys[2], keys[3], 1)        # FFR branch_a1
    f2_w, f2_b = init_linear(keys[4], keys[5], 1)        # FFR branch_a2
    a_w, a_b = init_linear(keys[6], keys[7], 1)          # A head
    st_w, st_b = init_linear(keys[8], keys[9], 4)        # stenosis Linear(512, 4)
    x = jax.random.normal(keys[10], (B, FEATURES), jnp.float32)

    # Fuse the five projections into one (512, 8) weight / (8,) bias.
    w_all = jnp.concatenate([mi_w, f1_w, f2_w, a_w, st_w], axis=0)   # (8, 512)
    b_all = jnp.concatenate([mi_b, f1_b, f2_b, a_b, st_b], axis=0)   # (8,)
    w_t = jnp.transpose(w_all)                                       # (512, 8)

    outs = multitask_heads_forward(x, w_t, b_all)
    outs = jax.block_until_ready(outs)
    mi_out, ffr_out1, ffr_out2, a_out, st_out = outs

    # Pure-JAX reference (mirrors the PyTorch module semantics).
    mi_ref = jax.nn.sigmoid(x @ mi_w.T + mi_b)
    f1_ref = 0.6 + 0.8 * jax.nn.sigmoid(x @ f1_w.T + f1_b)
    f2_ref = 0.6 + 0.8 * jax.nn.sigmoid(x @ f2_w.T + f2_b)
    a_ref = 0.8 * jax.nn.sigmoid(x @ a_w.T + a_b)
    st_ref = x @ st_w.T + st_b

    assert mi_out.shape == (B, 1) and ffr_out1.shape == (B, 1)
    assert ffr_out2.shape == (B, 1) and a_out.shape == (B, 1)
    assert st_out.shape == (B, 4)
    assert jnp.allclose(mi_out, mi_ref, atol=1e-4, rtol=1e-4)
    assert jnp.allclose(ffr_out1, f1_ref, atol=1e-4, rtol=1e-4)
    assert jnp.allclose(ffr_out2, f2_ref, atol=1e-4, rtol=1e-4)
    assert jnp.allclose(a_out, a_ref, atol=1e-4, rtol=1e-4)
    assert jnp.allclose(st_out, st_ref, atol=1e-4, rtol=1e-4)

    print("KERNEL_OK")
</pallas_src>

<mosaic_0001>
module attributes {stable_mosaic.version = 11 : i64} {
  func.func @_fused_heads_kernel(%arg0: i32, %arg1: memref<8x512xf32, #tpu.memory_space<vmem>>, %arg2: memref<512x8xf32, #tpu.memory_space<vmem>>, %arg3: memref<1x8xf32, #tpu.memory_space<vmem>>, %arg4: memref<8x8xf32, #tpu.memory_space<vmem>>) attributes {dimension_semantics = [#tpu.dimension_semantics<parallel>], iteration_bounds = array<i64: 1>, scalar_prefetch = 0 : i64, scratch_operands = 0 : i64, tpu.core_type = #tpu.core_type<tc>, window_params = [{transform_indices = @transform_0, window_bounds = array<i64: 8, 512>}, {pipeline_mode = #tpu.pipeline_mode<synchronous>, transform_indices = @transform_1, window_bounds = array<i64: 512, 8>}, {pipeline_mode = #tpu.pipeline_mode<synchronous>, transform_indices = @transform_2, window_bounds = array<i64: 1, 8>}, {transform_indices = @transform_3, window_bounds = array<i64: 8, 8>}]} {
    %c0 = arith.constant 0 : index
    %c0_0 = arith.constant 0 : index
    %0 = vector.load %arg1[%c0, %c0_0] : memref<8x512xf32, #tpu.memory_space<vmem>>, vector<8x512xf32>
    %c0_1 = arith.constant 0 : index
    %c0_2 = arith.constant 0 : index
    %1 = vector.load %arg2[%c0_1, %c0_2] : memref<512x8xf32, #tpu.memory_space<vmem>>, vector<512x8xf32>
    %cst = arith.constant dense<0.000000e+00> : vector<8x8xf32>
    %2 = tpu.matmul %0, %1, %cst {dimension_numbers = #tpu.dot_dimension_numbers<[1], [0], [0], [1], [0, 0, 1, 1], [], []>} : vector<8x512xf32>, vector<512x8xf32>, vector<8x8xf32> -> vector<8x8xf32>
    %c0_3 = arith.constant 0 : index
    %c0_4 = arith.constant 0 : index
    %3 = vector.load %arg3[%c0_3, %c0_4] : memref<1x8xf32, #tpu.memory_space<vmem>>, vector<1x8xf32>
    %4 = vector.broadcast %3 : vector<1x8xf32> to vector<8x8xf32>
    %5 = arith.addf %2, %4 : vector<8x8xf32>
    %6 = arith.negf %5 : vector<8x8xf32>
    %7 = math.exp %6 : vector<8x8xf32>
    %cst_5 = arith.constant 1.000000e+00 : f32
    %8 = vector.broadcast %cst_5 : f32 to vector<8x8xf32>
    %9 = arith.addf %8, %7 : vector<8x8xf32>
    %10 = arith.divf %8, %9 : vector<8x8xf32>
    %11 = tpu.iota {dimensions = array<i32: 1>} : vector<8x8xi32>
    %c0_i32 = arith.constant 0 : i32
    %12 = vector.broadcast %c0_i32 : i32 to vector<8x8xi32>
    %13 = arith.cmpi eq, %11, %12 : vector<8x8xi32>
    %c2_i32 = arith.constant 2 : i32
    %14 = vector.broadcast %c2_i32 : i32 to vector<8x8xi32>
    %15 = arith.cmpi sle, %11, %14 : vector<8x8xi32>
    %cst_6 = arith.constant 8.000000e-01 : f32
    %16 = vector.broadcast %cst_6 : f32 to vector<8x8xf32>
    %17 = arith.mulf %16, %10 : vector<8x8xf32>
    %cst_7 = arith.constant 6.000000e-01 : f32
    %18 = vector.broadcast %cst_7 : f32 to vector<8x8xf32>
    %19 = arith.addf %18, %17 : vector<8x8xf32>
    %c3_i32 = arith.constant 3 : i32
    %20 = vector.broadcast %c3_i32 : i32 to vector<8x8xi32>
    %21 = arith.cmpi eq, %11, %20 : vector<8x8xi32>
    %cst_8 = arith.constant 8.000000e-01 : f32
    %22 = vector.broadcast %cst_8 : f32 to vector<8x8xf32>
    %23 = arith.mulf %22, %10 : vector<8x8xf32>
    %24 = arith.select %21, %23, %5 : vector<8x8xi1>, vector<8x8xf32>
    %25 = arith.select %15, %19, %24 : vector<8x8xi1>, vector<8x8xf32>
    %26 = arith.select %13, %10, %25 : vector<8x8xi1>, vector<8x8xf32>
    %c0_9 = arith.constant 0 : index
    %c0_10 = arith.constant 0 : index
    %27 = vector.load %arg4[%c0_9, %c0_10] : memref<8x8xf32, #tpu.memory_space<vmem>>, vector<8x8xf32>
    tpu.vector_store %arg4[%c0_9, %c0_10], %26 {strides = array<i32>} : memref<8x8xf32, #tpu.memory_space<vmem>>, vector<8x8xf32>,
    return
  }
  func.func @transform_0(%arg0: i32) -> (i32, i32) {
    %c0_i32 = arith.constant 0 : i32
    %c0_i32_0 = arith.constant 0 : i32
    return %arg0, %c0_i32 : i32, i32
  }
  func.func @transform_1(%arg0: i32) -> (i32, i32) {
    %c0_i32 = arith.constant 0 : i32
    %c0_i32_0 = arith.constant 0 : i32
    %c0_i32_1 = arith.constant 0 : i32
    return %c0_i32, %c0_i32_0 : i32, i32
  }
  func.func @transform_2(%arg0: i32) -> (i32, i32) {
    %c0_i32 = arith.constant 0 : i32
    %c0_i32_0 = arith.constant 0 : i32
    %c0_i32_1 = arith.constant 0 : i32
    return %c0_i32, %c0_i32_0 : i32, i32
  }
  func.func @transform_3(%arg0: i32) -> (i32, i32) {
    %c0_i32 = arith.constant 0 : i32
    %c0_i32_0 = arith.constant 0 : i32
    return %arg0, %c0_i32 : i32, i32
  }
}

</mosaic_0001>

<llo_original>
// kernel: tpu_custom_call.1
$region0: #{tpu_custom_call.1}
  #allocation0 [shape = 'u32[]', space=smem, size = 0x4, offset = 0x4, fixed_abs, tag = 'smem constant byte address 0x4 - core index']
  #allocation1 [shape = 'u32[144,128]{1,0:T(1,128)}', space=vmem, size = 0x12000, scoped, tag = 'internal scratch']
  %s0 = inlined_call_operand.vmem [shape: f32[8,512], index: 0, kind: input, shape index: {}]
  %s1 = inlined_call_operand.vmem [shape: f32[512,8], index: 1, kind: input, shape index: {}]
  %s2 = inlined_call_operand.vmem [shape: f32[1,8], index: 2, kind: input, shape index: {}]
  %s3 = inlined_call_operand.hbm [shape: f32[8,8], index: 3, kind: output, shape index: {}]
  %s4 = sld [smem:[#allocation0]]
  $region22: #{tpu_custom_call.1} parent=0
    _
  %s6 = ssub.s32 1, %s4
  %s7 = scalar_select 0, %s6, %s4
  $region1: #{tpu_custom_call.1} parent=0
    #allocation2 [shape = 'u8[4096]{0}', space=vmem, size = 0x1000, scoped, tag = 'output window, operand 0, single buffered']
    #allocation3 [shape = 's32[1]{0}', space=sflag, size = 0x4, scoped, tag = 'scoped memory for tpu_custom_call.1']
    %8 = vsyncpa [#allocation3], 0
    // Predicated region
    $region2: #{tpu_custom_call.1} parent=1 // pred_check
      _
    $region3: #{tpu_custom_call.1} parent=1 // pred_check_branch
      %10 = sbr.rel (0) target = $region5
    $region4: #{tpu_custom_call.1} parent=1 // pred_region
      _
    $region5: #{tpu_custom_call.1} parent=1 // pred_fallthru
      _
    // Predicated region
    $region6: #{tpu_custom_call.1} parent=1 // pred_check
      _
    $region7: #{tpu_custom_call.1} parent=1 // pred_check_branch
      %12 = sbr.rel (0) target = $region9
    $region8: #{tpu_custom_call.1} parent=1 // pred_region
      _
    $region9: #{tpu_custom_call.1} parent=1 // pred_fallthru
      _
    // Predicated region
    $region10: #{tpu_custom_call.1} parent=1 // pred_check
      _
    $region11: #{tpu_custom_call.1} parent=1 // pred_check_branch
      %14 = sbr.rel (0) target = $region13
    $region12: #{tpu_custom_call.1} parent=1 // pred_region
      _
    $region13: #{tpu_custom_call.1} parent=1 // pred_fallthru
      _
    %v15 = vld [vmem:[%s0] sm:$0xff]
    %v16 = vld [vmem:[%s0 + $0x8] sm:$0xff]
    %v17 = vld [vmem:[%s0 + $0x10] sm:$0xff]
    %v18 = vld [vmem:[%s0 + $0x18] sm:$0xff]
    %v19 = vld [vmem:[%s1] sm:$0xff]
    %v20 = vld [vmem:[%s1 + $0x8] sm:$0xff]
    %v21 = vld [vmem:[%s1 + $0x10] sm:$0xff]
    %v22 = vld [vmem:[%s1 + $0x18] sm:$0xff]
    %v23 = vld [vmem:[%s1 + $0x20] sm:$0xff]
    %v24 = vld [vmem:[%s1 + $0x28] sm:$0xff]
    %v25 = vld [vmem:[%s1 + $0x30] sm:$0xff]
    %v26 = vld [vmem:[%s1 + $0x38] sm:$0xff]
    %v27 = vld [vmem:[%s1 + $0x40] sm:$0xff]
    %v28 = vld [vmem:[%s1 + $0x48] sm:$0xff]
    %v29 = vld [vmem:[%s1 + $0x50] sm:$0xff]
    %v30 = vld [vmem:[%s1 + $0x58] sm:$0xff]
    %v31 = vld [vmem:[%s1 + $0x60] sm:$0xff]
    %v32 = vld [vmem:[%s1 + $0x68] sm:$0xff]
    %v33 = vld [vmem:[%s1 + $0x70] sm:$0xff]
    %v34 = vld [vmem:[%s1 + $0x78] sm:$0xff]
    %v35 = vld [vmem:[%s1 + $0x80] sm:$0xff]
    %v36 = vld [vmem:[%s1 + $0x88] sm:$0xff]
    %v37 = vld [vmem:[%s1 + $0x90] sm:$0xff]
    %v38 = vld [vmem:[%s1 + $0x98] sm:$0xff]
    %v39 = vld [vmem:[%s1 + $0xa0] sm:$0xff]
    %v40 = vld [vmem:[%s1 + $0xa8] sm:$0xff]
    %v41 = vld [vmem:[%s1 + $0xb0] sm:$0xff]
    %v42 = vld [vmem:[%s1 + $0xb8] sm:$0xff]
    %v43 = vld [vmem:[%s1 + $0xc0] sm:$0xff]
    %v44 = vld [vmem:[%s1 + $0xc8] sm:$0xff]
    %v45 = vld [vmem:[%s1 + $0xd0] sm:$0xff]
    %v46 = vld [vmem:[%s1 + $0xd8] sm:$0xff]
    %v47 = vld [vmem:[%s1 + $0xe0] sm:$0xff]
    %v48 = vld [vmem:[%s1 + $0xe8] sm:$0xff]
    %v49 = vld [vmem:[%s1 + $0xf0] sm:$0xff]
    %v50 = vld [vmem:[%s1 + $0xf8] sm:$0xff]
    %v51 = vld [vmem:[%s1 + $0x100] sm:$0xff]
    %v52 = vld [vmem:[%s1 + $0x108] sm:$0xff]
    %v53 = vld [vmem:[%s1 + $0x110] sm:$0xff]
    %v54 = vld [vmem:[%s1 + $0x118] sm:$0xff]
    %v55 = vld [vmem:[%s1 + $0x120] sm:$0xff]
    %v56 = vld [vmem:[%s1 + $0x128] sm:$0xff]
    %v57 = vld [vmem:[%s1 + $0x130] sm:$0xff]
    %v58 = vld [vmem:[%s1 + $0x138] sm:$0xff]
    %v59 = vld [vmem:[%s1 + $0x140] sm:$0xff]
    %v60 = vld [vmem:[%s1 + $0x148] sm:$0xff]
    %v61 = vld [vmem:[%s1 + $0x150] sm:$0xff]
    %v62 = vld [vmem:[%s1 + $0x158] sm:$0xff]
    %v63 = vld [vmem:[%s1 + $0x160] sm:$0xff]
    %v64 = vld [vmem:[%s1 + $0x168] sm:$0xff]
    %v65 = vld [vmem:[%s1 + $0x170] sm:$0xff]
    %v66 = vld [vmem:[%s1 + $0x178] sm:$0xff]
    %v67 = vld [vmem:[%s1 + $0x180] sm:$0xff]
    %v68 = vld [vmem:[%s1 + $0x188] sm:$0xff]
    %v69 = vld [vmem:[%s1 + $0x190] sm:$0xff]
    %v70 = vld [vmem:[%s1 + $0x198] sm:$0xff]
    %v71 = vld [vmem:[%s1 + $0x1a0] sm:$0xff]
    %v72 = vld [vmem:[%s1 + $0x1a8] sm:$0xff]
    %v73 = vld [vmem:[%s1 + $0x1b0] sm:$0xff]
    %v74 = vld [vmem:[%s1 + $0x1b8] sm:$0xff]
    %v75 = vld [vmem:[%s1 + $0x1c0] sm:$0xff]
    %v76 = vld [vmem:[%s1 + $0x1c8] sm:$0xff]
    %v77 = vld [vmem:[%s1 + $0x1d0] sm:$0xff]
    %v78 = vld [vmem:[%s1 + $0x1d8] sm:$0xff]
    %v79 = vld [vmem:[%s1 + $0x1e0] sm:$0xff]
    %v80 = vld [vmem:[%s1 + $0x1e8] sm:$0xff]
    %v81 = vld [vmem:[%s1 + $0x1f0] sm:$0xff]
    %v82 = vld [vmem:[%s1 + $0x1f8] sm:$0xff]
    %v83 = vld [vmem:[%s2] sm:$0x1]
    %v85 = vlaneseq
    %v86 = vshrl.u32 %v85, 7
    %v87 = vsub.s32 0, %v86
    %v88 = vrot.slane %v83, %v87
    %90 = vmatprep.subr.mxu0 0.0
    %91 = vmatpush1.msra.mxu0 %v34
    %92 = vmatprep.subr.mxu0 0.0
    %93 = vmatpush1.msra.mxu0 %v33
    %94 = vmatprep.subr.mxu0 0.0
    %95 = vmatpush1.msra.mxu0 %v32
    %96 = vmatprep.subr.mxu0 0.0
    %97 = vmatpush1.msra.mxu0 %v31
    %98 = vmatprep.subr.mxu0 0.0
    %99 = vmatpush1.msra.mxu0 %v30
    %100 = vmatprep.subr.mxu0 0.0
    %101 = vmatpush1.msra.mxu0 %v29
    %102 = vmatprep.subr.mxu0 0.0
    %103 = vmatpush1.msra.mxu0 %v28
    %104 = vmatprep.subr.mxu0 0.0
    %105 = vmatpush1.msra.mxu0 %v27
    %106 = vmatprep.subr.mxu0 0.0
    %107 = vmatpush1.msra.mxu0 %v26
    %108 = vmatprep.subr.mxu0 0.0
    %109 = vmatpush1.msra.mxu0 %v25
    %110 = vmatprep.subr.mxu0 0.0
    %111 = vmatpush1.msra.mxu0 %v24
    %112 = vmatprep.subr.mxu0 0.0
    %113 = vmatpush1.msra.mxu0 %v23
    %114 = vmatprep.subr.mxu0 0.0
    %115 = vmatpush1.msra.mxu0 %v22
    %116 = vmatprep.subr.mxu0 0.0
    %117 = vmatpush1.msra.mxu0 %v21
    %118 = vmatprep.subr.mxu0 0.0
    %119 = vmatpush1.msra.mxu0 %v20
    %120 = vmatprep.subr.mxu0 0.0
    %121 = vmatpush1.msra.mxu0 %v19
    %122 = vmatprep.subr.mxu0 0.0
    %123 = vmatpush2.msra.mxu0 %v50
    %124 = vmatprep.subr.mxu0 0.0
    %125 = vmatpush2.msra.mxu0 %v49
    %126 = vmatprep.subr.mxu0 0.0
    %127 = vmatpush2.msra.mxu0 %v48
    %128 = vmatprep.subr.mxu0 0.0
    %129 = vmatpush2.msra.mxu0 %v47
    %130 = vmatprep.subr.mxu0 0.0
    %131 = vmatpush2.msra.mxu0 %v46
    %132 = vmatprep.subr.mxu0 0.0
    %133 = vmatpush2.msra.mxu0 %v45
    %134 = vmatprep.subr.mxu0 0.0
    %135 = vmatpush2.msra.mxu0 %v44
    %136 = vmatprep.subr.mxu0 0.0
    %137 = vmatpush2.msra.mxu0 %v43
    %138 = vmatprep.subr.mxu0 0.0
    %139 = vmatpush2.msra.mxu0 %v42
    %140 = vmatprep.subr.mxu0 0.0
    %141 = vmatpush2.msra.mxu0 %v41
    %142 = vmatprep.subr.mxu0 0.0
    %143 = vmatpush2.msra.mxu0 %v40
    %144 = vmatprep.subr.mxu0 0.0
    %145 = vmatpush2.msra.mxu0 %v39
    %146 = vmatprep.subr.mxu0 0.0
    %147 = vmatpush2.msra.mxu0 %v38
    %148 = vmatprep.subr.mxu0 0.0
    %149 = vmatpush2.msra.mxu0 %v37
    %150 = vmatprep.subr.mxu0 0.0
    %151 = vmatpush2.msra.mxu0 %v36
    %152 = vmatprep.subr.mxu0 0.0
    %153 = vmatpush2.msra.mxu0 %v35
    %154 = vmatprep.mubr.f32.mxu0 %v16
    %155 = vmatmul.mubr.f32.gmra.mxu0 %v15
    %v156 = vpop.f32.mrf.mxu0
    %v157 = vadd.f32 %v88, %v156
    %v158 = vpop.f32.mrf.mxu0
    %159 = vdwg.mxu0
    %160 = vmatprep.subr.mxu0 0.0
    %161 = vmatpush1.msra.mxu0 %v66
    %162 = vmatprep.subr.mxu0 0.0
    %163 = vmatpush1.msra.mxu0 %v65
    %164 = vmatprep.subr.mxu0 0.0
    %165 = vmatpush1.msra.mxu0 %v64
    %166 = vmatprep.subr.mxu0 0.0
    %167 = vmatpush1.msra.mxu0 %v63
    %168 = vmatprep.subr.mxu0 0.0
    %169 = vmatpush1.msra.mxu0 %v62
    %170 = vmatprep.subr.mxu0 0.0
    %171 = vmatpush1.msra.mxu0 %v61
    %172 = vmatprep.subr.mxu0 0.0
    %173 = vmatpush1.msra.mxu0 %v60
    %174 = vmatprep.subr.mxu0 0.0
    %175 = vmatpush1.msra.mxu0 %v59
    %176 = vmatprep.subr.mxu0 0.0
    %177 = vmatpush1.msra.mxu0 %v58
    %178 = vmatprep.subr.mxu0 0.0
    %179 = vmatpush1.msra.mxu0 %v57
    %180 = vmatprep.subr.mxu0 0.0
    %181 = vmatpush1.msra.mxu0 %v56
    %182 = vmatprep.subr.mxu0 0.0
    %183 = vmatpush1.msra.mxu0 %v55
    %184 = vmatprep.subr.mxu0 0.0
    %185 = vmatpush1.msra.mxu0 %v54
    %186 = vmatprep.subr.mxu0 0.0
    %187 = vmatpush1.msra.mxu0 %v53
    %188 = vmatprep.subr.mxu0 0.0
    %189 = vmatpush1.msra.mxu0 %v52
    %190 = vmatprep.subr.mxu0 0.0
    %191 = vmatpush1.msra.mxu0 %v51
    %192 = vmatprep.subr.mxu0 0.0
    %193 = vmatpush2.msra.mxu0 %v82
    %194 = vmatprep.subr.mxu0 0.0
    %195 = vmatpush2.msra.mxu0 %v81
    %196 = vmatprep.subr.mxu0 0.0
    %197 = vmatpush2.msra.mxu0 %v80
    %198 = vmatprep.subr.mxu0 0.0
    %199 = vmatpush2.msra.mxu0 %v79
    %200 = vmatprep.subr.mxu0 0.0
    %201 = vmatpush2.msra.mxu0 %v78
    %202 = vmatprep.subr.mxu0 0.0
    %203 = vmatpush2.msra.mxu0 %v77
    %204 = vmatprep.subr.mxu0 0.0
    %205 = vmatpush2.msra.mxu0 %v76
    %206 = vmatprep.subr.mxu0 0.0
    %207 = vmatpush2.msra.mxu0 %v75
    %208 = vmatprep.subr.mxu0 0.0
    %209 = vmatpush2.msra.mxu0 %v74
    %210 = vmatprep.subr.mxu0 0.0
    %211 = vmatpush2.msra.mxu0 %v73
    %212 = vmatprep.subr.mxu0 0.0
    %213 = vmatpush2.msra.mxu0 %v72
    %214 = vmatprep.subr.mxu0 0.0
    %215 = vmatpush2.msra.mxu0 %v71
    %216 = vmatprep.subr.mxu0 0.0
    %217 = vmatpush2.msra.mxu0 %v70
    %218 = vmatprep.subr.mxu0 0.0
    %219 = vmatpush2.msra.mxu0 %v69
    %220 = vmatprep.subr.mxu0 0.0
    %221 = vmatpush2.msra.mxu0 %v68
    %222 = vmatprep.subr.mxu0 0.0
    %223 = vmatpush2.msra.mxu0 %v67
    %224 = vmatprep.mubr.f32.mxu0 %v18
    %225 = vmatmul.mubr.f32.gmra.mxu0 %v17
    %v226 = vpop.f32.mrf.mxu0
    %v227 = vadd.f32 %v157, %v226
    %v228 = vpop.f32.mrf.mxu0
    %229 = vdwg.mxu0
    %v230 = vxor.u32 %v227, 2147483648
    %v231 = vmul.f32 %v230, 1.442695
    %v232 = vpow.pop %v231
    %v233 = vadd.f32 %v232, 1.0
    %v234 = vrcp.pop %v233
    %v235 = vmul.f32 1.0, %v234
    %v236 = vlaneseq
    %v237 = vand.u32 %v236, 127
    %vm238 = vcmp.eq.s32.totalorder %v237, 0
    %vm239 = vcmp.le.s32.totalorder %v237, 2
    %v240 = vmul.f32 %v235, 0.8
    %v241 = vadd.f32 %v240, 0.6
    %vm242 = vcmp.eq.s32.totalorder %v237, 3
    %v243 = vsel %vm242, %v240, %v227
    %v244 = vsel %vm239, %v241, %v243
    %v245 = vsel %vm238, %v235, %v244
    %vm246 = vcmask 64512
    %247 = vst.msk [vmem:[#allocation2] sm:$0xff] %vm246, %v245
    // Predicated region
    $region14: #{tpu_custom_call.1} parent=1 // pred_check
      _
    $region15: #{tpu_custom_call.1} parent=1 // pred_check_branch
      %249 = sbr.rel (0) target = $region17
    $region16: #{tpu_custom_call.1} parent=1 // pred_region
      %s251 = ssub.s32 128, 128
      %252 = vsyncadd [#allocation3], %s251
      %s254 = sshll.u32 [#allocation2], 4
      %s255 = int_to_ptr.vmem [resolvable:$true] %s254
      %257 = dma.vmem_to_hbm [thread:$0]  %s255, 128, %s3, [#allocation3]
    $region17: #{tpu_custom_call.1} parent=1 // pred_fallthru
      _
    // Predicated region
    $region18: #{tpu_custom_call.1} parent=1 // pred_check
      _
    $region19: #{tpu_custom_call.1} parent=1 // pred_check_branch
      %259 = sbr.rel (0) target = $region21
    $region20: #{tpu_custom_call.1} parent=1 // pred_region
      %260 = dma.done [#allocation3], 128
    $region21: #{tpu_custom_call.1} parent=1 // pred_fallthru
      _
    %261 = vsyncpa [#allocation3], 1

</llo_original>
